<compile_context>
chip_gen: v6e
topology: v6e:2x2x1
jax: 0.10.0
libtpu: 0.0.40
codegen_flags: <defaults>
</compile_context>

<pallas_src>
import jax
import jax.numpy as jnp
from jax.experimental import pallas as pl
from jax.experimental.pallas import tpu as pltpu


def _matmul_kernel(x_ref, w_ref, o_ref, acc_ref):
    # x_ref: (tm, tk)   stereo-interleaved input tile
    # w_ref: (tk, tn)   channel-block-diagonal weight tile
    # o_ref: (tm, tn)   output tile of (B, 2H) = cat(left, right) on dim 1
    # acc_ref: (tm, tn) f32 accumulator, resident across the K grid axis
    @pl.when(pl.program_id(2) == 0)
    def _():
        acc_ref[...] = jnp.zeros_like(acc_ref)

    acc_ref[...] += jnp.dot(
        x_ref[...], w_ref[...], preferred_element_type=jnp.float32
    )

    @pl.when(pl.program_id(2) == pl.num_programs(2) - 1)
    def _():
        o_ref[...] = acc_ref[...].astype(o_ref.dtype)


def _pick_tile(dim, candidates):
    """Largest MXU/(8,128)-friendly candidate dividing `dim`, else full dim."""
    for cand in candidates:
        if cand <= dim and dim % cand == 0:
            return cand
    return dim  # full extent is always a legal block size


def expand_stereo_weight(w):
    """(T, H) per-channel weight -> (2T, 2H) channel-block-diagonal weight.

    With x flattened as x2[b, 2t+c] = x[b, t, c]:
      x2 @ W2 == cat((x[:,:,0] @ W, x[:,:,1] @ W), dim=1)
    One-time parameter preparation in a real model.
    """
    T, H = w.shape
    w2 = jnp.zeros((2 * T, 2 * H), dtype=w.dtype)
    w2 = w2.at[0::2, :H].set(w)   # even (left) samples -> left output columns
    w2 = w2.at[1::2, H:].set(w)   # odd (right) samples -> right output columns
    return w2


def _stereo_matmul(a, b):
    """Tiled (M, K) @ (K, N) -> (M, N) with f32 accumulation on the MXU."""
    M, K = a.shape
    K2, N = b.shape
    assert K == K2

    tm = _pick_tile(M, (256, 128, 8))       # sublane axis: %8 or full extent
    tk = _pick_tile(K, (512, 256, 128))     # lane axis of A: %128 or full
    tn = _pick_tile(N, (512, 256, 128))     # lane axis of B/out: %128 or full
    grid = (M // tm, N // tn, K // tk)      # reduction axis (K) last

    return pl.pallas_call(
        _matmul_kernel,
        out_shape=jax.ShapeDtypeStruct((M, N), a.dtype),
        grid_spec=pltpu.PrefetchScalarGridSpec(
            num_scalar_prefetch=0,
            grid=grid,
            in_specs=[
                pl.BlockSpec((tm, tk), lambda i, j, k: (i, k)),
                pl.BlockSpec((tk, tn), lambda i, j, k: (k, j)),
            ],
            out_specs=pl.BlockSpec((tm, tn), lambda i, j, k: (i, j)),
            scratch_shapes=[pltpu.VMEM((tm, tn), jnp.float32)],
        ),
        compiler_params=pltpu.CompilerParams(
            # M/N parallel -> shards across v7x's 2 TensorCores; K is a reduction.
            dimension_semantics=("parallel", "parallel", "arbitrary"),
            # Headroom under v7x's 64 MiB physical VMEM; double-buffered tiles
            # at these block sizes use only a few MiB.
            vmem_limit_bytes=48 * 1024 * 1024,
        ),
    )(a, b)


def base_encoder_forward(x, w):
    """x: (B, T, 2) float32, w: (T, H) float32 -> (B, 2*H) float32."""
    B, T, C = x.shape
    assert C == 2, "BaseEncoder.forward expects stereo input on the last axis"
    # Free reshape (contiguous): x2[b, 2t+c] = x[b, t, c].  No HBM transpose.
    x2 = x.reshape(B, 2 * T)
    # One-time weight prep (would live at parameter-init time in a real model).
    w2 = expand_stereo_weight(w)
    return _stereo_matmul(x2, w2)


if __name__ == "__main__":
    key = jax.random.PRNGKey(0)
    kx, kw = jax.random.split(key)

    # Small shapes consistent with the module: batch=2, T=256 audio samples,
    # 2 stereo channels, synthetic per-channel encoder hidden size H=128.
    B, T, H = 2, 256, 128
    x = jax.random.normal(kx, (B, T, 2), dtype=jnp.float32)
    w = jax.random.normal(kw, (T, H), dtype=jnp.float32) / jnp.sqrt(jnp.float32(T))

    out = base_encoder_forward(x, w)
    jax.block_until_ready(out)

    # Pure-JAX reference of the same forward semantics.
    ref = jnp.concatenate([x[:, :, 0] @ w, x[:, :, 1] @ w], axis=1)
    assert out.shape == (B, 2 * H), out.shape
    assert jnp.allclose(out, ref, atol=1e-4, rtol=1e-4), "mismatch vs reference"

    print("KERNEL_OK")
</pallas_src>

<mosaic_0001>
module attributes {stable_mosaic.version = 11 : i64} {
  func.func @_matmul_kernel(%arg0: i32, %arg1: i32, %arg2: i32, %arg3: memref<2x512xf32, #tpu.memory_space<vmem>>, %arg4: memref<512x256xf32, #tpu.memory_space<vmem>>, %arg5: memref<2x256xf32, #tpu.memory_space<vmem>>, %arg6: memref<2x256xf32, #tpu.memory_space<vmem>>) attributes {dimension_semantics = [#tpu.dimension_semantics<parallel>, #tpu.dimension_semantics<parallel>, #tpu.dimension_semantics<arbitrary>], iteration_bounds = array<i64: 1, 1, 1>, scalar_prefetch = 0 : i64, scratch_operands = 1 : i64, tpu.core_type = #tpu.core_type<tc>, window_params = [{transform_indices = @transform_0, window_bounds = array<i64: 2, 512>}, {transform_indices = @transform_1, window_bounds = array<i64: 512, 256>}, {transform_indices = @transform_2, window_bounds = array<i64: 2, 256>}]} {
    %c0_i32 = arith.constant 0 : i32
    %0 = arith.cmpi eq, %arg2, %c0_i32 : i32
    %1 = arith.extui %0 : i1 to i32
    %c0_i32_0 = arith.constant 0 : i32
    %2 = arith.cmpi ne, %1, %c0_i32_0 : i32
    scf.if %2 {
      %cst_10 = arith.constant 0.000000e+00 : f32
      %12 = vector.broadcast %cst_10 : f32 to vector<2x256xf32>
      %c0_11 = arith.constant 0 : index
      %c0_12 = arith.constant 0 : index
      %13 = vector.load %arg6[%c0_11, %c0_12] : memref<2x256xf32, #tpu.memory_space<vmem>>, vector<2x256xf32>
      tpu.vector_store %arg6[%c0_11, %c0_12], %12 {strides = array<i32>} : memref<2x256xf32, #tpu.memory_space<vmem>>, vector<2x256xf32>,
    } else {
    }
    %c0 = arith.constant 0 : index
    %c0_1 = arith.constant 0 : index
    %3 = vector.load %arg6[%c0, %c0_1] : memref<2x256xf32, #tpu.memory_space<vmem>>, vector<2x256xf32>
    %c0_2 = arith.constant 0 : index
    %c0_3 = arith.constant 0 : index
    %4 = vector.load %arg3[%c0_2, %c0_3] : memref<2x512xf32, #tpu.memory_space<vmem>>, vector<2x512xf32>
    %c0_4 = arith.constant 0 : index
    %c0_5 = arith.constant 0 : index
    %5 = vector.load %arg4[%c0_4, %c0_5] : memref<512x256xf32, #tpu.memory_space<vmem>>, vector<512x256xf32>
    %cst = arith.constant dense<0.000000e+00> : vector<2x256xf32>
    %6 = tpu.matmul %4, %5, %cst {dimension_numbers = #tpu.dot_dimension_numbers<[1], [0], [0], [1], [0, 0, 1, 1], [], []>} : vector<2x512xf32>, vector<512x256xf32>, vector<2x256xf32> -> vector<2x256xf32>
    %7 = arith.addf %3, %6 : vector<2x256xf32>
    %c0_6 = arith.constant 0 : index
    %c0_7 = arith.constant 0 : index
    %8 = vector.load %arg6[%c0_6, %c0_7] : memref<2x256xf32, #tpu.memory_space<vmem>>, vector<2x256xf32>
    tpu.vector_store %arg6[%c0_6, %c0_7], %7 {strides = array<i32>} : memref<2x256xf32, #tpu.memory_space<vmem>>, vector<2x256xf32>,
    %c0_i32_8 = arith.constant 0 : i32
    %9 = arith.cmpi eq, %arg2, %c0_i32_8 : i32
    %10 = arith.extui %9 : i1 to i32
    %c0_i32_9 = arith.constant 0 : i32
    %11 = arith.cmpi ne, %10, %c0_i32_9 : i32
    scf.if %11 {
      %c0_10 = arith.constant 0 : index
      %c0_11 = arith.constant 0 : index
      %12 = vector.load %arg6[%c0_10, %c0_11] : memref<2x256xf32, #tpu.memory_space<vmem>>, vector<2x256xf32>
      %c0_12 = arith.constant 0 : index
      %c0_13 = arith.constant 0 : index
      %13 = vector.load %arg5[%c0_12, %c0_13] : memref<2x256xf32, #tpu.memory_space<vmem>>, vector<2x256xf32>
      tpu.vector_store %arg5[%c0_12, %c0_13], %12 {strides = array<i32>} : memref<2x256xf32, #tpu.memory_space<vmem>>, vector<2x256xf32>,
    } else {
    }
    return
  }
  func.func @transform_0(%arg0: i32, %arg1: i32, %arg2: i32) -> (i32, i32) {
    %c0_i32 = arith.constant 0 : i32
    return %arg0, %arg2 : i32, i32
  }
  func.func @transform_1(%arg0: i32, %arg1: i32, %arg2: i32) -> (i32, i32) {
    %c0_i32 = arith.constant 0 : i32
    return %arg2, %arg1 : i32, i32
  }
  func.func @transform_2(%arg0: i32, %arg1: i32, %arg2: i32) -> (i32, i32) {
    %c0_i32 = arith.constant 0 : i32
    return %arg0, %arg1 : i32, i32
  }
}

</mosaic_0001>

<llo_original>
// kernel: tpu_custom_call.1
$region0: #{tpu_custom_call.1}
  #allocation0 [shape = 'u32[]', space=smem, size = 0x4, offset = 0x4, fixed_abs, tag = 'smem constant byte address 0x4 - core index']
  #allocation1 [shape = 'u32[144,128]{1,0:T(1,128)}', space=vmem, size = 0x12000, scoped, tag = 'internal scratch']
  #allocation2 [shape = 'f32[2,256]{1,0:T(2,128)}', space=vmem, size = 0x800, scoped, tag = 'scratch operand']
  %s0 = inlined_call_operand.hbm [shape: f32[2,512], index: 0, kind: input, shape index: {}]
  %s1 = inlined_call_operand.hbm [shape: f32[512,256], index: 1, kind: input, shape index: {}]
  %s2 = inlined_call_operand.hbm [shape: f32[2,256], index: 2, kind: output, shape index: {}]
  %s3 = sld [smem:[#allocation0]]
  $region34: #{tpu_custom_call.1} parent=0
    _
  %s5 = ssub.s32 1, %s3
  %s6 = scalar_select 0, %s5, %s3
  $region1: #{tpu_custom_call.1} parent=0
    #allocation3 [shape = 'u8[4096]{0}', space=vmem, size = 0x1000, scoped, tag = 'input window, operand 0, single buffered']
    #allocation4 [shape = 's32[1]{0}', space=sflag, size = 0x4, scoped, tag = 'scoped memory for tpu_custom_call.1']
    #allocation5 [shape = 's32[1]{0}', space=sflag, size = 0x4, scoped, tag = 'scoped memory for tpu_custom_call.1']
    #allocation6 [shape = 'u8[524288]{0}', space=vmem, size = 0x80000, scoped, tag = 'input window, operand 1, single buffered']
    #allocation7 [shape = 's32[1]{0}', space=sflag, size = 0x4, scoped, tag = 'scoped memory for tpu_custom_call.1']
    #allocation8 [shape = 'u8[2048]{0}', space=vmem, size = 0x800, scoped, tag = 'output window, operand 0, single buffered']
    %7 = vsyncpa [#allocation4], 0
    %8 = vsyncpa [#allocation7], 0
    %9 = vsyncpa [#allocation5], 0
    // Predicated region
    $region2: #{tpu_custom_call.1} parent=1 // pred_check
      _
    $region3: #{tpu_custom_call.1} parent=1 // pred_check_branch
      %11 = sbr.rel (0) target = $region5
    $region4: #{tpu_custom_call.1} parent=1 // pred_region
      %s13 = ssub.s32 128, 128
      %14 = vsyncadd [#allocation4], %s13
      %s16 = sshll.u32 [#allocation3], 4
      %s17 = int_to_ptr.vmem [resolvable:$true] %s16
      %19 = dma.hbm_to_vmem [thread:$0]  %s0, 128, %s17, [#allocation4]
    $region5: #{tpu_custom_call.1} parent=1 // pred_fallthru
      _
    // Predicated region
    $region6: #{tpu_custom_call.1} parent=1 // pred_check
      _
    $region7: #{tpu_custom_call.1} parent=1 // pred_check_branch
      %21 = sbr.rel (0) target = $region9
    $region8: #{tpu_custom_call.1} parent=1 // pred_region
      %s23 = ssub.s32 16384, 16384
      %24 = vsyncadd [#allocation7], %s23
      %s25 = sshll.u32 [#allocation6], 4
      %s26 = int_to_ptr.vmem [resolvable:$true] %s25
      %31 = dma.hbm_to_vmem [thread:$0]  %s1, 16384, %s26, [#allocation7], 256, 256, 16
    $region9: #{tpu_custom_call.1} parent=1 // pred_fallthru
      _
    // Predicated region
    $region10: #{tpu_custom_call.1} parent=1 // pred_check
      _
    $region11: #{tpu_custom_call.1} parent=1 // pred_check_branch
      %33 = sbr.rel (0) target = $region13
    $region12: #{tpu_custom_call.1} parent=1 // pred_region
      %34 = dma.done [#allocation4], 128
    $region13: #{tpu_custom_call.1} parent=1 // pred_fallthru
      _
    // Predicated region
    $region14: #{tpu_custom_call.1} parent=1 // pred_check
      _
    $region15: #{tpu_custom_call.1} parent=1 // pred_check_branch
      %36 = sbr.rel (0) target = $region17
    $region16: #{tpu_custom_call.1} parent=1 // pred_region
      %37 = dma.done [#allocation7], 16384
    $region17: #{tpu_custom_call.1} parent=1 // pred_fallthru
      _
    %p38 = scmp.eq.s32.totalorder 0, 0
    // Predicated region
    $region18: #{tpu_custom_call.1} parent=1 // pred_check
      %p39 = pneg %p38
    $region19: #{tpu_custom_call.1} parent=1 // pred_check_branch
      %41 = sbr.rel (%p39) target = $region21
    $region20: #{tpu_custom_call.1} parent=1 // pred_region
      %42 = vst [vmem:[#allocation2] sm:$0xf] 0.0
    $region21: #{tpu_custom_call.1} parent=1 // pred_fallthru
      _
    %v43 = vld [vmem:[#allocation2] sm:$0xf]
    %v44 = vld [vmem:[#allocation3] sm:$0xff]
    %v45 = vld [vmem:[#allocation6] sm:$0xff]
    %v46 = vld [vmem:[#allocation6 + $0x8] sm:$0xff]
    %v47 = vld [vmem:[#allocation6 + $0x10] sm:$0xff]
    %v48 = vld [vmem:[#allocation6 + $0x18] sm:$0xff]
    %v49 = vld [vmem:[#allocation6 + $0x20] sm:$0xff]
    %v50 = vld [vmem:[#allocation6 + $0x28] sm:$0xff]
    %v51 = vld [vmem:[#allocation6 + $0x30] sm:$0xff]
    %v52 = vld [vmem:[#allocation6 + $0x38] sm:$0xff]
    %v53 = vld [vmem:[#allocation6 + $0x40] sm:$0xff]
    %v54 = vld [vmem:[#allocation6 + $0x48] sm:$0xff]
    %v55 = vld [vmem:[#allocation6 + $0x50] sm:$0xff]
    %v56 = vld [vmem:[#allocation6 + $0x58] sm:$0xff]
    %v57 = vld [vmem:[#allocation6 + $0x60] sm:$0xff]
    %v58 = vld [vmem:[#allocation6 + $0x68] sm:$0xff]
    %v59 = vld [vmem:[#allocation6 + $0x70] sm:$0xff]
    %v60 = vld [vmem:[#allocation6 + $0x78] sm:$0xff]
    %v61 = vld [vmem:[#allocation6 + $0x80] sm:$0xff]
    %v62 = vld [vmem:[#allocation6 + $0x88] sm:$0xff]
    %v63 = vld [vmem:[#allocation6 + $0x90] sm:$0xff]
    %v64 = vld [vmem:[#allocation6 + $0x98] sm:$0xff]
    %v65 = vld [vmem:[#allocation6 + $0xa0] sm:$0xff]
    %v66 = vld [vmem:[#allocation6 + $0xa8] sm:$0xff]
    %v67 = vld [vmem:[#allocation6 + $0xb0] sm:$0xff]
    %v68 = vld [vmem:[#allocation6 + $0xb8] sm:$0xff]
    %v69 = vld [vmem:[#allocation6 + $0xc0] sm:$0xff]
    %v70 = vld [vmem:[#allocation6 + $0xc8] sm:$0xff]
    %v71 = vld [vmem:[#allocation6 + $0xd0] sm:$0xff]
    %v72 = vld [vmem:[#allocation6 + $0xd8] sm:$0xff]
    %v73 = vld [vmem:[#allocation6 + $0xe0] sm:$0xff]
    %v74 = vld [vmem:[#allocation6 + $0xe8] sm:$0xff]
    %v75 = vld [vmem:[#allocation6 + $0xf0] sm:$0xff]
    %v76 = vld [vmem:[#allocation6 + $0xf8] sm:$0xff]
    %v77 = vld [vmem:[#allocation6 + $0x100] sm:$0xff]
    %v78 = vld [vmem:[#allocation6 + $0x108] sm:$0xff]
    %v79 = vld [vmem:[#allocation6 + $0x110] sm:$0xff]
    %v80 = vld [vmem:[#allocation6 + $0x118] sm:$0xff]
    %v81 = vld [vmem:[#allocation6 + $0x120] sm:$0xff]
    %v82 = vld [vmem:[#allocation6 + $0x128] sm:$0xff]
    %v83 = vld [vmem:[#allocation6 + $0x130] sm:$0xff]
    %v84 = vld [vmem:[#allocation6 + $0x138] sm:$0xff]
    %v85 = vld [vmem:[#allocation6 + $0x140] sm:$0xff]
    %v86 = vld [vmem:[#allocation6 + $0x148] sm:$0xff]
    %v87 = vld [vmem:[#allocation6 + $0x150] sm:$0xff]
    %v88 = vld [vmem:[#allocation6 + $0x158] sm:$0xff]
    %v89 = vld [vmem:[#allocation6 + $0x160] sm:$0xff]
    %v90 = vld [vmem:[#allocation6 + $0x168] sm:$0xff]
    %v91 = vld [vmem:[#allocation6 + $0x170] sm:$0xff]
    %v92 = vld [vmem:[#allocation6 + $0x178] sm:$0xff]
    %v93 = vld [vmem:[#allocation6 + $0x180] sm:$0xff]
    %v94 = vld [vmem:[#allocation6 + $0x188] sm:$0xff]
    %v95 = vld [vmem:[#allocation6 + $0x190] sm:$0xff]
    %v96 = vld [vmem:[#allocation6 + $0x198] sm:$0xff]
    %v97 = vld [vmem:[#allocation6 + $0x1a0] sm:$0xff]
    %v98 = vld [vmem:[#allocation6 + $0x1a8] sm:$0xff]
    %v99 = vld [vmem:[#allocation6 + $0x1b0] sm:$0xff]
    %v100 = vld [vmem:[#allocation6 + $0x1b8] sm:$0xff]
    %v101 = vld [vmem:[#allocation6 + $0x1c0] sm:$0xff]
    %v102 = vld [vmem:[#allocation6 + $0x1c8] sm:$0xff]
    %v103 = vld [vmem:[#allocation6 + $0x1d0] sm:$0xff]
    %v104 = vld [vmem:[#allocation6 + $0x1d8] sm:$0xff]
    %v105 = vld [vmem:[#allocation6 + $0x1e0] sm:$0xff]
    %v106 = vld [vmem:[#allocation6 + $0x1e8] sm:$0xff]
    %v107 = vld [vmem:[#allocation6 + $0x1f0] sm:$0xff]
    %v108 = vld [vmem:[#allocation6 + $0x1f8] sm:$0xff]
    %v109 = vld [vmem:[#allocation6 + $0x200] sm:$0xff]
    %v110 = vld [vmem:[#allocation6 + $0x208] sm:$0xff]
    %v111 = vld [vmem:[#allocation6 + $0x210] sm:$0xff]
    %v112 = vld [vmem:[#allocation6 + $0x218] sm:$0xff]
    %v113 = vld [vmem:[#allocation6 + $0x220] sm:$0xff]
    %v114 = vld [vmem:[#allocation6 + $0x228] sm:$0xff]
    %v115 = vld [vmem:[#allocation6 + $0x230] sm:$0xff]
    %v116 = vld [vmem:[#allocation6 + $0x238] sm:$0xff]
    %v117 = vld [vmem:[#allocation6 + $0x240] sm:$0xff]
    %v118 = vld [vmem:[#allocation6 + $0x248] sm:$0xff]
    %v119 = vld [vmem:[#allocation6 + $0x250] sm:$0xff]
    %v120 = vld [vmem:[#allocation6 + $0x258] sm:$0xff]
    %v121 = vld [vmem:[#allocation6 + $0x260] sm:$0xff]
    %v122 = vld [vmem:[#allocation6 + $0x268] sm:$0xff]
    %v123 = vld [vmem:[#allocation6 + $0x270] sm:$0xff]
    %v124 = vld [vmem:[#allocation6 + $0x278] sm:$0xff]
    %v125 = vld [vmem:[#allocation6 + $0x280] sm:$0xff]
    %v126 = vld [vmem:[#allocation6 + $0x288] sm:$0xff]
    %v127 = vld [vmem:[#allocation6 + $0x290] sm:$0xff]
    %v128 = vld [vmem:[#allocation6 + $0x298] sm:$0xff]
    %v129 = vld [vmem:[#allocation6 + $0x2a0] sm:$0xff]
    %v130 = vld [vmem:[#allocation6 + $0x2a8] sm:$0xff]
    %v131 = vld [vmem:[#allocation6 + $0x2b0] sm:$0xff]
    %v132 = vld [vmem:[#allocation6 + $0x2b8] sm:$0xff]
    %v133 = vld [vmem:[#allocation6 + $0x2c0] sm:$0xff]
    %v134 = vld [vmem:[#allocation6 + $0x2c8] sm:$0xff]
    %v135 = vld [vmem:[#allocation6 + $0x2d0] sm:$0xff]
    %v136 = vld [vmem:[#allocation6 + $0x2d8] sm:$0xff]
    %v137 = vld [vmem:[#allocation6 + $0x2e0] sm:$0xff]
    %v138 = vld [vmem:[#allocation6 + $0x2e8] sm:$0xff]
    %v139 = vld [vmem:[#allocation6 + $0x2f0] sm:$0xff]
    %v140 = vld [vmem:[#allocation6 + $0x2f8] sm:$0xff]
    %v141 = vld [vmem:[#allocation6 + $0x300] sm:$0xff]
    %v142 = vld [vmem:[#allocation6 + $0x308] sm:$0xff]
    %v143 = vld [vmem:[#allocation6 + $0x310] sm:$0xff]
    %v144 = vld [vmem:[#allocation6 + $0x318] sm:$0xff]
    %v145 = vld [vmem:[#allocation6 + $0x320] sm:$0xff]
    %v146 = vld [vmem:[#allocation6 + $0x328] sm:$0xff]
    %v147 = vld [vmem:[#allocation6 + $0x330] sm:$0xff]
    %v148 = vld [vmem:[#allocation6 + $0x338] sm:$0xff]
    %v149 = vld [vmem:[#allocation6 + $0x340] sm:$0xff]
    %v150 = vld [vmem:[#allocation6 + $0x348] sm:$0xff]
    %v151 = vld [vmem:[#allocation6 + $0x350] sm:$0xff]
    %v152 = vld [vmem:[#allocation6 + $0x358] sm:$0xff]
    %v153 = vld [vmem:[#allocation6 + $0x360] sm:$0xff]
    %v154 = vld [vmem:[#allocation6 + $0x368] sm:$0xff]
    %v155 = vld [vmem:[#allocation6 + $0x370] sm:$0xff]
    %v156 = vld [vmem:[#allocation6 + $0x378] sm:$0xff]
    %v157 = vld [vmem:[#allocation6 + $0x380] sm:$0xff]
    %v158 = vld [vmem:[#allocation6 + $0x388] sm:$0xff]
    %v159 = vld [vmem:[#allocation6 + $0x390] sm:$0xff]
    %v160 = vld [vmem:[#allocation6 + $0x398] sm:$0xff]
    %v161 = vld [vmem:[#allocation6 + $0x3a0] sm:$0xff]
    %v162 = vld [vmem:[#allocation6 + $0x3a8] sm:$0xff]
    %v163 = vld [vmem:[#allocation6 + $0x3b0] sm:$0xff]
    %v164 = vld [vmem:[#allocation6 + $0x3b8] sm:$0xff]
    %v165 = vld [vmem:[#allocation6 + $0x3c0] sm:$0xff]
    %v166 = vld [vmem:[#allocation6 + $0x3c8] sm:$0xff]
    %v167 = vld [vmem:[#allocation6 + $0x3d0] sm:$0xff]
    %v168 = vld [vmem:[#allocation6 + $0x3d8] sm:$0xff]
    %v169 = vld [vmem:[#allocation6 + $0x3e0] sm:$0xff]
    %v170 = vld [vmem:[#allocation6 + $0x3e8] sm:$0xff]
    %v171 = vld [vmem:[#allocation6 + $0x3f0] sm:$0xff]
    %v172 = vld [vmem:[#allocation6 + $0x3f8] sm:$0xff]
    %v174 = vcombine.high %v44, %v44
    %v176 = vunpack.c.l.s4 1983009808
    %v177 = vunpack.c.0.s8 %v176
    %v178 = vlaneseq
    %v179 = vshrl.u32 %v178, 7
    %v180 = vsub.s32 %v177, %v179
    %v181 = vrot.slane %v44, %v180
    %v183 = vunpack.c.l.s4 1983009808
    %v184 = vunpack.c.0.s8 %v183
    %v185 = vlaneseq
    %v186 = vshrl.u32 %v185, 7
    %v187 = vsub.s32 %v184, %v186
    %v188 = vrot.slane %v174, %v187
    %v189 = vcombine.high %v181, %v181
    %v190 = vcombine.high %v188, %v188
    %195 = vmatprep.subr.mxu0 %v76
    %196 = vmatpush1.msra.mxu0 %v75
    %197 = vmatprep.subr.mxu0 %v74
    %198 = vmatpush1.msra.mxu0 %v73
    %199 = vmatprep.subr.mxu0 %v72
    %200 = vmatpush1.msra.mxu0 %v71
    %201 = vmatprep.subr.mxu0 %v70
    %202 = vmatpush1.msra.mxu0 %v69
    %203 = vmatprep.subr.mxu0 %v68
    %204 = vmatpush1.msra.mxu0 %v67
    %205 = vmatprep.subr.mxu0 %v66
    %206 = vmatpush1.msra.mxu0 %v65
    %207 = vmatprep.subr.mxu0 %v64
    %208 = vmatpush1.msra.mxu0 %v63
    %209 = vmatprep.subr.mxu0 %v62
    %210 = vmatpush1.msra.mxu0 %v61
    %211 = vmatprep.subr.mxu0 %v60
    %212 = vmatpush1.msra.mxu0 %v59
    %213 = vmatprep.subr.mxu0 %v58
    %214 = vmatpush1.msra.mxu0 %v57
    %215 = vmatprep.subr.mxu0 %v56
    %216 = vmatpush1.msra.mxu0 %v55
    %217 = vmatprep.subr.mxu0 %v54
    %218 = vmatpush1.msra.mxu0 %v53
    %219 = vmatprep.subr.mxu0 %v52
    %220 = vmatpush1.msra.mxu0 %v51
    %221 = vmatprep.subr.mxu0 %v50
    %222 = vmatpush1.msra.mxu0 %v49
    %223 = vmatprep.subr.mxu0 %v48
    %224 = vmatpush1.msra.mxu0 %v47
    %225 = vmatprep.subr.mxu0 %v46
    %226 = vmatpush1.msra.mxu0 %v45
    %227 = vmatprep.subr.mxu0 %v108
    %228 = vmatpush2.msra.mxu0 %v107
    %229 = vmatprep.subr.mxu0 %v106
    %230 = vmatpush2.msra.mxu0 %v105
    %231 = vmatprep.subr.mxu0 %v104
    %232 = vmatpush2.msra.mxu0 %v103
    %233 = vmatprep.subr.mxu0 %v102
    %234 = vmatpush2.msra.mxu0 %v101
    %235 = vmatprep.subr.mxu0 %v100
    %236 = vmatpush2.msra.mxu0 %v99
    %237 = vmatprep.subr.mxu0 %v98
    %238 = vmatpush2.msra.mxu0 %v97
    %239 = vmatprep.subr.mxu0 %v96
    %240 = vmatpush2.msra.mxu0 %v95
    %241 = vmatprep.subr.mxu0 %v94
    %242 = vmatpush2.msra.mxu0 %v93
    %243 = vmatprep.subr.mxu0 %v92
    %244 = vmatpush2.msra.mxu0 %v91
    %245 = vmatprep.subr.mxu0 %v90
    %246 = vmatpush2.msra.mxu0 %v89
    %247 = vmatprep.subr.mxu0 %v88
    %248 = vmatpush2.msra.mxu0 %v87
    %249 = vmatprep.subr.mxu0 %v86
    %250 = vmatpush2.msra.mxu0 %v85
    %251 = vmatprep.subr.mxu0 %v84
    %252 = vmatpush2.msra.mxu0 %v83
    %253 = vmatprep.subr.mxu0 %v82
    %254 = vmatpush2.msra.mxu0 %v81
    %255 = vmatprep.subr.mxu0 %v80
    %256 = vmatpush2.msra.mxu0 %v79
    %257 = vmatprep.subr.mxu0 %v78
    %258 = vmatpush2.msra.mxu0 %v77
    %259 = vmatprep.mubr.f32.mxu0 %v189
    %260 = vmatmul.mubr.f32.gmra.mxu0 %v181
    %v261 = vpop.f32.mrf.mxu0
    %v262 = vadd.f32 0.0, %v261
    %v263 = vpop.f32.mrf.mxu0
    %v264 = vadd.f32 0.0, %v263
    %265 = vdwg.mxu0
    %266 = vmatprep.subr.mxu0 %v140
    %267 = vmatpush1.msra.mxu0 %v139
    %268 = vmatprep.subr.mxu0 %v138
    %269 = vmatpush1.msra.mxu0 %v137
    %270 = vmatprep.subr.mxu0 %v136
    %271 = vmatpush1.msra.mxu0 %v135
    %272 = vmatprep.subr.mxu0 %v134
    %273 = vmatpush1.msra.mxu0 %v133
    %274 = vmatprep.subr.mxu0 %v132
    %275 = vmatpush1.msra.mxu0 %v131
    %276 = vmatprep.subr.mxu0 %v130
    %277 = vmatpush1.msra.mxu0 %v129
    %278 = vmatprep.subr.mxu0 %v128
    %279 = vmatpush1.msra.mxu0 %v127
    %280 = vmatprep.subr.mxu0 %v126
    %281 = vmatpush1.msra.mxu0 %v125
    %282 = vmatprep.subr.mxu0 %v124
    %283 = vmatpush1.msra.mxu0 %v123
    %284 = vmatprep.subr.mxu0 %v122
    %285 = vmatpush1.msra.mxu0 %v121
    %286 = vmatprep.subr.mxu0 %v120
    %287 = vmatpush1.msra.mxu0 %v119
    %288 = vmatprep.subr.mxu0 %v118
    %289 = vmatpush1.msra.mxu0 %v117
    %290 = vmatprep.subr.mxu0 %v116
    %291 = vmatpush1.msra.mxu0 %v115
    %292 = vmatprep.subr.mxu0 %v114
    %293 = vmatpush1.msra.mxu0 %v113
    %294 = vmatprep.subr.mxu0 %v112
    %295 = vmatpush1.msra.mxu0 %v111
    %296 = vmatprep.subr.mxu0 %v110
    %297 = vmatpush1.msra.mxu0 %v109
    %298 = vmatprep.subr.mxu0 %v172
    %299 = vmatpush2.msra.mxu0 %v171
    %300 = vmatprep.subr.mxu0 %v170
    %301 = vmatpush2.msra.mxu0 %v169
    %302 = vmatprep.subr.mxu0 %v168
    %303 = vmatpush2.msra.mxu0 %v167
    %304 = vmatprep.subr.mxu0 %v166
    %305 = vmatpush2.msra.mxu0 %v165
    %306 = vmatprep.subr.mxu0 %v164
    %307 = vmatpush2.msra.mxu0 %v163
    %308 = vmatprep.subr.mxu0 %v162
    %309 = vmatpush2.msra.mxu0 %v161
    %310 = vmatprep.subr.mxu0 %v160
    %311 = vmatpush2.msra.mxu0 %v159
    %312 = vmatprep.subr.mxu0 %v158
    %313 = vmatpush2.msra.mxu0 %v157
    %314 = vmatprep.subr.mxu0 %v156
    %315 = vmatpush2.msra.mxu0 %v155
    %316 = vmatprep.subr.mxu0 %v154
    %317 = vmatpush2.msra.mxu0 %v153
    %318 = vmatprep.subr.mxu0 %v152
    %319 = vmatpush2.msra.mxu0 %v151
    %320 = vmatprep.subr.mxu0 %v150
    %321 = vmatpush2.msra.mxu0 %v149
    %322 = vmatprep.subr.mxu0 %v148
    %323 = vmatpush2.msra.mxu0 %v147
    %324 = vmatprep.subr.mxu0 %v146
    %325 = vmatpush2.msra.mxu0 %v145
    %326 = vmatprep.subr.mxu0 %v144
    %327 = vmatpush2.msra.mxu0 %v143
    %328 = vmatprep.subr.mxu0 %v142
    %329 = vmatpush2.msra.mxu0 %v141
    %330 = vmatprep.mubr.f32.mxu0 %v190
    %331 = vmatmul.mubr.f32.gmra.mxu0 %v188
    %v332 = vpop.f32.mrf.mxu0
    %v333 = vadd.f32 %v262, %v332
    %v334 = vpop.f32.mrf.mxu0
    %v335 = vadd.f32 %v264, %v334
    %336 = vdwg.mxu0
    %v339 = vcombine.low %v333, %v335
    %v341 = vunpack.c.l.s4 1983009808
    %v342 = vunpack.c.0.s8 %v341
    %v343 = vlaneseq
    %v344 = vshrl.u32 %v343, 7
    %v345 = vsub.s32 %v342, %v344
    %v346 = vrot.slane %v339, %v345
    %v348 = vadd.f32 %v43, %v346
    %349 = vst [vmem:[#allocation2] sm:$0xf] %v348
    // Predicated region
    $region22: #{tpu_custom_call.1} parent=1 // pred_check
      %p350 = pneg %p38
    $region23: #{tpu_custom_call.1} parent=1 // pred_check_branch
      %352 = sbr.rel (%p350) target = $region25
    $region24: #{tpu_custom_call.1} parent=1 // pred_region
      %v353 = vld [vmem:[#allocation2] sm:$0xf]
      %354 = vst [vmem:[#allocation8] sm:$0xf] %v353
    $region25: #{tpu_custom_call.1} parent=1 // pred_fallthru
      _
    // Predicated region
    $region26: #{tpu_custom_call.1} parent=1 // pred_check
      _
    $region27: #{tpu_custom_call.1} parent=1 // pred_check_branch
      %356 = sbr.rel (0) target = $region29
    $region28: #{tpu_custom_call.1} parent=1 // pred_region
      %s358 = ssub.s32 64, 64
      %359 = vsyncadd [#allocation5], %s358
      %s361 = sshll.u32 [#allocation8], 4
      %s362 = int_to_ptr.vmem [resolvable:$true] %s361
      %364 = dma.vmem_to_hbm [thread:$0]  %s362, 64, %s2, [#allocation5]
    $region29: #{tpu_custom_call.1} parent=1 // pred_fallthru
      _
    // Predicated region
    $region30: #{tpu_custom_call.1} parent=1 // pred_check
      _
    $region31: #{tpu_custom_call.1} parent=1 // pred_check_branch
      %366 = sbr.rel (0) target = $region33
    $region32: #{tpu_custom_call.1} parent=1 // pred_region
      %367 = dma.done [#allocation5], 64
    $region33: #{tpu_custom_call.1} parent=1 // pred_fallthru
      _
    %368 = vsyncpa [#allocation4], 1
    %369 = vsyncpa [#allocation7], 1
    %370 = vsyncpa [#allocation5], 1

</llo_original>
